<compile_context>
chip_gen: v6e
topology: v6e:2x2x1
jax: 0.10.0
libtpu: 0.0.40
codegen_flags: <defaults>
</compile_context>

<pallas_src>
import jax
import jax.numpy as jnp
import numpy as np
from jax.experimental import pallas as pl
from jax.experimental.pallas import tpu as pltpu


def _temporal_pool_kernel(x_ref, o_ref):
    """x_ref: (bt, n_segment, tc) VMEM tile; o_ref: (bt, t_out, tc) VMEM tile.

    out[:, t, :] = max(x[:, 2t-1, :], x[:, 2t, :], x[:, 2t+1, :]) with
    out-of-range time indices dropped (equivalent to -inf padding).  Each
    output row is produced by a short load -> max -> max -> store chain, so
    live registers stay bounded and every store is lane-dense (tc >= 128).
    """
    n_segment = x_ref.shape[1]
    t_out = o_ref.shape[1]
    for t in range(t_out):                      # static unroll; t_out is small
        lo = max(2 * t - 1, 0)
        hi = min(2 * t + 1, n_segment - 1)
        m = x_ref[:, lo, :]
        for i in range(lo + 1, hi + 1):
            m = jnp.maximum(m, x_ref[:, i, :])
        o_ref[:, t, :] = m


def _vmem_capacity_bytes():
    """Per-core VMEM capacity; conservative (v7x = 64 MiB) fallback."""
    try:
        info = pltpu.get_tpu_info()
        cap = getattr(info, "vmem_capacity_bytes", None)
        if cap:
            return int(cap)
    except Exception:
        pass
    return 64 << 20


def _eff_tile_bytes(rows, lanes, itemsize):
    """VMEM footprint of a (rows, lanes) tile incl. (8,128) tiling and
    sub-32-bit sublane packing (bf16 packs 16 rows / native tile, int8 32)."""
    pack = max(1, 4 // itemsize)                # rows per 32-bit sublane slot
    sub = 8 * pack
    r = -(-rows // sub) * sub
    l = -(-lanes // 128) * 128
    return r * l * itemsize


def _choose_tiles(n_batch, n_segment, t_out, c_pad, itemsize,
                  target_block_bytes, max_vmem_limit):
    """Pick (bt, tc) so one input block is ~target_block_bytes, the grid keeps
    >= 2 steps when possible, and double-buffered blocks fit the VMEM clamp."""
    col_bytes = _eff_tile_bytes(n_segment, 128, itemsize)   # one 128-lane slab
    tc = max(128, (target_block_bytes // col_bytes) * 128)  # no divisor cliff
    tc = min(tc, c_pad)

    # Batch fusion fills whatever budget is left (with or without lane tiling).
    bt = max(1, target_block_bytes // _eff_tile_bytes(n_segment, tc, itemsize))
    bt = min(bt, n_batch)

    # Keep >= 2 grid steps (v7x megacore + pipelining) when the problem allows.
    if pl.cdiv(n_batch, bt) * pl.cdiv(c_pad, tc) < 2:
        if n_batch >= 2:
            bt = -(-n_batch // 2)
        elif c_pad >= 256:
            tc = max(128, (-(-(c_pad // 2) // 128)) * 128)

    def blocks_bytes(bt_, tc_):
        return bt_ * (_eff_tile_bytes(n_segment, tc_, itemsize)
                      + _eff_tile_bytes(t_out, tc_, itemsize))

    # Guard: shrink until double-buffered (in + out) blocks fit under the clamp.
    while 2 * blocks_bytes(bt, tc) + (4 << 20) > max_vmem_limit:
        if bt > 1:
            bt = (bt + 1) // 2
        elif tc > 128:
            tc = max(128, ((tc // 2) // 128) * 128)
        else:
            break
    return bt, tc, blocks_bytes(bt, tc)


def temporal_pool(x, n_segment, target_block_bytes=None):
    """Pallas equivalent of TemporalPool.temporal_pool.

    x: (nt, c, h, w) with nt % n_segment == 0.  Returns
    (n_batch * t_out, c, h, w) with t_out = (n_segment - 1) // 2 + 1; for the
    usual even n_segment this equals (nt // 2, c, h, w) as in the PyTorch
    module (for odd n_segment the PyTorch `view(nt // 2, ...)` itself fails).
    """
    nt, c, h, w = x.shape
    assert n_segment > 0, "n_segment must be positive"
    assert nt % n_segment == 0, "nt must be divisible by n_segment"
    n_batch = nt // n_segment
    t_out = (n_segment - 1) // 2 + 1
    C = c * h * w
    itemsize = jnp.dtype(x.dtype).itemsize

    vmem_cap = _vmem_capacity_bytes()
    max_vmem_limit = (vmem_cap * 3) // 4        # ~48 MiB on v7x, ~96 MiB on v5e/v6e
    if target_block_bytes is None:
        # ~8 MiB blocks on 64 MiB parts, ~16 MiB on 128 MiB parts.
        target_block_bytes = min(max(vmem_cap // 8, 2 << 20), 16 << 20)

    # Pad C up to a multiple of 128 so every DMA / store is lane-dense.
    c_pad = -(-C // 128) * 128
    x2 = x.reshape(n_batch, n_segment, C)
    if c_pad != C:
        x2 = jnp.pad(x2, ((0, 0), (0, 0), (0, c_pad - C)))

    bt, tc, block_bytes = _choose_tiles(n_batch, n_segment, t_out, c_pad,
                                        itemsize, target_block_bytes,
                                        max_vmem_limit)
    grid = (pl.cdiv(n_batch, bt), pl.cdiv(c_pad, tc))
    vmem_limit = int(min(max(2 * block_bytes + (4 << 20), 16 << 20),
                         max_vmem_limit))

    out = pl.pallas_call(
        _temporal_pool_kernel,
        out_shape=jax.ShapeDtypeStruct((n_batch, t_out, c_pad), x.dtype),
        grid_spec=pl.GridSpec(
            grid=grid,
            in_specs=[pl.BlockSpec((bt, n_segment, tc),
                                   lambda b, cb: (b, 0, cb))],
            out_specs=pl.BlockSpec((bt, t_out, tc),
                                   lambda b, cb: (b, 0, cb)),
        ),
        compiler_params=pltpu.CompilerParams(
            dimension_semantics=("parallel", "parallel"),
            vmem_limit_bytes=vmem_limit,
        ),
        cost_estimate=pl.CostEstimate(
            flops=2 * n_batch * t_out * c_pad,
            transcendentals=0,
            bytes_accessed=n_batch * (n_segment + t_out) * c_pad * itemsize,
        ),
    )(x2)

    if c_pad != C:
        out = out[:, :, :C]
    return out.reshape(n_batch * t_out, c, h, w)


def temporal_pool_module_forward(x, n_segment, **kwargs):
    """Full TemporalPool.forward with net = identity."""
    return temporal_pool(x, n_segment, **kwargs)


def _reference(x, n_segment):
    """Pure-JAX reference matching F.max_pool3d((3,1,1),(2,1,1),(1,0,0))."""
    nt, c, h, w = x.shape
    n_batch = nt // n_segment
    t_out = (n_segment - 1) // 2 + 1
    xr = x.reshape(n_batch, n_segment, c, h, w)
    pad = jnp.pad(xr, ((0, 0), (1, 1), (0, 0), (0, 0), (0, 0)),
                  constant_values=-jnp.inf)
    pooled = jnp.stack(
        [pad[:, 2 * t:2 * t + 3].max(axis=1) for t in range(t_out)], axis=1)
    return pooled.reshape(n_batch * t_out, c, h, w)


if __name__ == "__main__":
    key = jax.random.PRNGKey(0)
    k1, k2 = jax.random.split(key)

    # 1) Canonical small shape: batch=2, n_segment=8, c=4, h=w=16.
    n_segment = 8
    n_batch = 2
    c, h, w = 4, 16, 16
    nt = n_batch * n_segment
    x = jax.random.normal(k1, (nt, c, h, w), dtype=jnp.float32)

    out = jax.block_until_ready(temporal_pool_module_forward(x, n_segment))
    ref = _reference(x, n_segment)
    assert out.shape == (nt // 2, c, h, w), out.shape
    np.testing.assert_allclose(np.asarray(out), np.asarray(ref), rtol=0, atol=0)

    # 2) bf16 path (exercises sublane-packing accounting); pooling stays bf16.
    x_bf16 = x.astype(jnp.bfloat16)
    out_bf16 = jax.block_until_ready(
        temporal_pool_module_forward(x_bf16, n_segment))
    ref_bf16 = _reference(x_bf16, n_segment)
    np.testing.assert_allclose(np.asarray(out_bf16, dtype=np.float32),
                               np.asarray(ref_bf16, dtype=np.float32),
                               rtol=0, atol=0)

    # 3) Non-128-aligned C (=300) and non-divisible batch fusion (n_batch=3):
    #    exercises lane padding + ragged batch blocks.
    x3 = jax.random.normal(k2, (3 * n_segment, 3, 10, 10), dtype=jnp.float32)
    out3 = jax.block_until_ready(temporal_pool(x3, n_segment))
    ref3 = _reference(x3, n_segment)
    np.testing.assert_allclose(np.asarray(out3), np.asarray(ref3),
                               rtol=0, atol=0)

    # 4) Tiny explicit block budget: forces lane tiling with a ragged lane block.
    out4 = jax.block_until_ready(
        temporal_pool(x3, n_segment, target_block_bytes=8 * 1024))
    np.testing.assert_allclose(np.asarray(out4), np.asarray(ref3),
                               rtol=0, atol=0)

    print("KERNEL_OK")
</pallas_src>

<mosaic_0001>
module attributes {stable_mosaic.version = 11 : i64} {
  func.func @_temporal_pool_kernel(%arg0: i32, %arg1: i32, %arg2: memref<1x8x1024xf32, #tpu.memory_space<vmem>>, %arg3: memref<1x4x1024xf32, #tpu.memory_space<vmem>>) attributes {dimension_semantics = [#tpu.dimension_semantics<parallel>, #tpu.dimension_semantics<parallel>], iteration_bounds = array<i64: 2, 1>, scalar_prefetch = 0 : i64, scratch_operands = 0 : i64, tpu.core_type = #tpu.core_type<tc>, window_params = [{transform_indices = @transform_0, window_bounds = array<i64: 1, 8, 1024>}, {transform_indices = @transform_1, window_bounds = array<i64: 1, 4, 1024>}]} {
    %c0 = arith.constant 0 : index
    %c0_0 = arith.constant 0 : index
    %c0_1 = arith.constant 0 : index
    %0 = vector.load %arg2[%c0, %c0_0, %c0_1] : memref<1x8x1024xf32, #tpu.memory_space<vmem>>, vector<1x1x1024xf32>
    %1 = vector.shape_cast %0 : vector<1x1x1024xf32> to vector<1x1024xf32>
    %c0_2 = arith.constant 0 : index
    %c1 = arith.constant 1 : index
    %c0_3 = arith.constant 0 : index
    %2 = vector.load %arg2[%c0_2, %c1, %c0_3] : memref<1x8x1024xf32, #tpu.memory_space<vmem>>, vector<1x1x1024xf32>
    %3 = vector.shape_cast %2 : vector<1x1x1024xf32> to vector<1x1024xf32>
    %4 = arith.maximumf %1, %3 : vector<1x1024xf32>
    %c0_4 = arith.constant 0 : index
    %c0_5 = arith.constant 0 : index
    %c0_6 = arith.constant 0 : index
    %5 = vector.load %arg3[%c0_4, %c0_5, %c0_6] : memref<1x4x1024xf32, #tpu.memory_space<vmem>>, vector<1x1x1024xf32>
    %6 = vector.shape_cast %5 : vector<1x1x1024xf32> to vector<1x1024xf32>
    %7 = vector.shape_cast %4 : vector<1x1024xf32> to vector<1x1x1024xf32>
    tpu.vector_store %arg3[%c0_4, %c0_5, %c0_6], %7 {strides = array<i32>} : memref<1x4x1024xf32, #tpu.memory_space<vmem>>, vector<1x1x1024xf32>,
    %c0_7 = arith.constant 0 : index
    %c1_8 = arith.constant 1 : index
    %c0_9 = arith.constant 0 : index
    %8 = vector.load %arg2[%c0_7, %c1_8, %c0_9] : memref<1x8x1024xf32, #tpu.memory_space<vmem>>, vector<1x1x1024xf32>
    %9 = vector.shape_cast %8 : vector<1x1x1024xf32> to vector<1x1024xf32>
    %c0_10 = arith.constant 0 : index
    %c2 = arith.constant 2 : index
    %c0_11 = arith.constant 0 : index
    %10 = vector.load %arg2[%c0_10, %c2, %c0_11] : memref<1x8x1024xf32, #tpu.memory_space<vmem>>, vector<1x1x1024xf32>
    %11 = vector.shape_cast %10 : vector<1x1x1024xf32> to vector<1x1024xf32>
    %12 = arith.maximumf %9, %11 : vector<1x1024xf32>
    %c0_12 = arith.constant 0 : index
    %c3 = arith.constant 3 : index
    %c0_13 = arith.constant 0 : index
    %13 = vector.load %arg2[%c0_12, %c3, %c0_13] : memref<1x8x1024xf32, #tpu.memory_space<vmem>>, vector<1x1x1024xf32>
    %14 = vector.shape_cast %13 : vector<1x1x1024xf32> to vector<1x1024xf32>
    %15 = arith.maximumf %12, %14 : vector<1x1024xf32>
    %c0_14 = arith.constant 0 : index
    %c1_15 = arith.constant 1 : index
    %c0_16 = arith.constant 0 : index
    %16 = vector.load %arg3[%c0_14, %c1_15, %c0_16] : memref<1x4x1024xf32, #tpu.memory_space<vmem>>, vector<1x1x1024xf32>
    %17 = vector.shape_cast %16 : vector<1x1x1024xf32> to vector<1x1024xf32>
    %18 = vector.shape_cast %15 : vector<1x1024xf32> to vector<1x1x1024xf32>
    tpu.vector_store %arg3[%c0_14, %c1_15, %c0_16], %18 {strides = array<i32>} : memref<1x4x1024xf32, #tpu.memory_space<vmem>>, vector<1x1x1024xf32>,
    %c0_17 = arith.constant 0 : index
    %c3_18 = arith.constant 3 : index
    %c0_19 = arith.constant 0 : index
    %19 = vector.load %arg2[%c0_17, %c3_18, %c0_19] : memref<1x8x1024xf32, #tpu.memory_space<vmem>>, vector<1x1x1024xf32>
    %20 = vector.shape_cast %19 : vector<1x1x1024xf32> to vector<1x1024xf32>
    %c0_20 = arith.constant 0 : index
    %c4 = arith.constant 4 : index
    %c0_21 = arith.constant 0 : index
    %21 = vector.load %arg2[%c0_20, %c4, %c0_21] : memref<1x8x1024xf32, #tpu.memory_space<vmem>>, vector<1x1x1024xf32>
    %22 = vector.shape_cast %21 : vector<1x1x1024xf32> to vector<1x1024xf32>
    %23 = arith.maximumf %20, %22 : vector<1x1024xf32>
    %c0_22 = arith.constant 0 : index
    %c5 = arith.constant 5 : index
    %c0_23 = arith.constant 0 : index
    %24 = vector.load %arg2[%c0_22, %c5, %c0_23] : memref<1x8x1024xf32, #tpu.memory_space<vmem>>, vector<1x1x1024xf32>
    %25 = vector.shape_cast %24 : vector<1x1x1024xf32> to vector<1x1024xf32>
    %26 = arith.maximumf %23, %25 : vector<1x1024xf32>
    %c0_24 = arith.constant 0 : index
    %c2_25 = arith.constant 2 : index
    %c0_26 = arith.constant 0 : index
    %27 = vector.load %arg3[%c0_24, %c2_25, %c0_26] : memref<1x4x1024xf32, #tpu.memory_space<vmem>>, vector<1x1x1024xf32>
    %28 = vector.shape_cast %27 : vector<1x1x1024xf32> to vector<1x1024xf32>
    %29 = vector.shape_cast %26 : vector<1x1024xf32> to vector<1x1x1024xf32>
    tpu.vector_store %arg3[%c0_24, %c2_25, %c0_26], %29 {strides = array<i32>} : memref<1x4x1024xf32, #tpu.memory_space<vmem>>, vector<1x1x1024xf32>,
    %c0_27 = arith.constant 0 : index
    %c5_28 = arith.constant 5 : index
    %c0_29 = arith.constant 0 : index
    %30 = vector.load %arg2[%c0_27, %c5_28, %c0_29] : memref<1x8x1024xf32, #tpu.memory_space<vmem>>, vector<1x1x1024xf32>
    %31 = vector.shape_cast %30 : vector<1x1x1024xf32> to vector<1x1024xf32>
    %c0_30 = arith.constant 0 : index
    %c6 = arith.constant 6 : index
    %c0_31 = arith.constant 0 : index
    %32 = vector.load %arg2[%c0_30, %c6, %c0_31] : memref<1x8x1024xf32, #tpu.memory_space<vmem>>, vector<1x1x1024xf32>
    %33 = vector.shape_cast %32 : vector<1x1x1024xf32> to vector<1x1024xf32>
    %34 = arith.maximumf %31, %33 : vector<1x1024xf32>
    %c0_32 = arith.constant 0 : index
    %c7 = arith.constant 7 : index
    %c0_33 = arith.constant 0 : index
    %35 = vector.load %arg2[%c0_32, %c7, %c0_33] : memref<1x8x1024xf32, #tpu.memory_space<vmem>>, vector<1x1x1024xf32>
    %36 = vector.shape_cast %35 : vector<1x1x1024xf32> to vector<1x1024xf32>
    %37 = arith.maximumf %34, %36 : vector<1x1024xf32>
    %c0_34 = arith.constant 0 : index
    %c3_35 = arith.constant 3 : index
    %c0_36 = arith.constant 0 : index
    %38 = vector.load %arg3[%c0_34, %c3_35, %c0_36] : memref<1x4x1024xf32, #tpu.memory_space<vmem>>, vector<1x1x1024xf32>
    %39 = vector.shape_cast %38 : vector<1x1x1024xf32> to vector<1x1024xf32>
    %40 = vector.shape_cast %37 : vector<1x1024xf32> to vector<1x1x1024xf32>
    tpu.vector_store %arg3[%c0_34, %c3_35, %c0_36], %40 {strides = array<i32>} : memref<1x4x1024xf32, #tpu.memory_space<vmem>>, vector<1x1x1024xf32>,
    return
  }
  func.func @transform_0(%arg0: i32, %arg1: i32) -> (i32, i32, i32) {
    %c0_i32 = arith.constant 0 : i32
    %c0_i32_0 = arith.constant 0 : i32
    return %arg0, %c0_i32, %arg1 : i32, i32, i32
  }
  func.func @transform_1(%arg0: i32, %arg1: i32) -> (i32, i32, i32) {
    %c0_i32 = arith.constant 0 : i32
    %c0_i32_0 = arith.constant 0 : i32
    return %arg0, %c0_i32, %arg1 : i32, i32, i32
  }
}

</mosaic_0001>

<llo_original>
// kernel: tpu_custom_call.1
$region0: #{tpu_custom_call.1}
  #allocation0 [shape = 'u32[]', space=smem, size = 0x4, offset = 0x4, fixed_abs, tag = 'smem constant byte address 0x4 - core index']
  #allocation1 [shape = 'u32[144,128]{1,0:T(1,128)}', space=vmem, size = 0x12000, scoped, tag = 'internal scratch']
  %s0 = inlined_call_operand.hbm [shape: f32[2,8,1024], index: 0, kind: input, shape index: {}]
  %s1 = inlined_call_operand.hbm [shape: f32[2,4,1024], index: 1, kind: output, shape index: {}]
  %s2 = sld [smem:[#allocation0]]
  $region41: #{tpu_custom_call.1} parent=0
    _
  %s4 = ssub.s32 1, %s2
  %s5 = scalar_select 0, %s4, %s2
  $region1: #{tpu_custom_call.1} parent=0
    #allocation2 [shape = 'u8[65536]{0}', space=vmem, size = 0x10000, scoped, tag = 'input window, operand 0']
    #allocation3 [shape = 's32[2]{0}', space=sflag, size = 0x8, scoped, tag = 'scoped memory for tpu_custom_call.1']
    #allocation4 [shape = 's32[2]{0}', space=sflag, size = 0x8, scoped, tag = 'scoped memory for tpu_custom_call.1']
    #allocation5 [shape = 'u8[32768]{0}', space=vmem, size = 0x8000, scoped, tag = 'output window, operand 0']
    %6 = vsyncpa [#allocation3], 0
    %s7 = scalar_lea.sflag [#allocation3], 1
    %8 = vsyncpa %s7, 0
    %9 = vsyncpa [#allocation4], 0
    %s10 = scalar_lea.sflag [#allocation4], 1
    %11 = vsyncpa %s10, 0
    loop: start=0, step=1, limit=4
    $region2: #{tpu_custom_call.1} parent=1 // loop_pre_header
      _
    $region3: #{tpu_custom_call.1} parent=1 // loop_header
      %s13 = sphi 0, %s17
      %p14 = scmp.ge.s32.totalorder %s13, 4
      %s20 = sphi 0, %s32
      %s21 = sphi 0, %s28
      %s22 = sphi 0, %s20
      %s23 = sphi 0, %s21
      %s24 = sphi 0, %s22
      %s25 = sphi 0, %s23
      %s37 = sphi 0, %s39
      %s40 = sphi 0, %s37
      %s41 = sphi 0, %s40
      %s57 = sphi 0, %s41
      %s65 = sphi 0, %s67
      %s68 = sphi 0, %s65
      %s69 = sphi 0, %s68
      %s85 = sphi 0, %s69
    $region4: #{tpu_custom_call.1} parent=1 // loop_header_branch
      %16 = sbr.rel (%p14) target = $region8
    $region5: #{tpu_custom_call.1} parent=1 // loop_body
      %s18 = ssub.s32 %s13, 1
      %s19 = ssub.s32 %s13, 2
      %s26 = sadd.s32 1, %s21
      %p27 = scmp.ge.s32.totalorder %s26, 1
      %s28 = scalar_select %p27, 0, %s26
      %s29 = sadd.s32 1, %s20
      %s30 = scalar_select %p27, %s29, %s20
      %p31 = scmp.ge.s32.totalorder %s30, 2
      %s32 = scalar_select %p31, 0, %s30
      %s33 = ssub.s32 %s20, %s32
      %s34 = ssub.s32 %s21, %s28
      %s35 = sor.u32 %s33, %s34
      %p36 = scmp.eq.s32.totalorder %s35, 0
      %s38 = sadd.s32 %s37, 1
      %s39 = scalar_select %p36, %s37, %s38
      %p42 = pneg %p36
      %p43 = scmp.eq.s32.totalorder %s13, 1
      %p44 = por %p42, %p43
      %p45 = scmp.ne.s32.totalorder %s37, %s40
      %p46 = scmp.eq.s32.totalorder %s13, 0
      %p47 = por %p45, %p46
      %p48 = scmp.ne.s32.totalorder %s37, %s40
      %p49 = scmp.eq.s32.totalorder %s18, 1
      %p50 = por %p48, %p49
      %p51 = scmp.ne.s32.totalorder %s40, %s41
      %p52 = scmp.eq.s32.totalorder %s18, 0
      %p53 = por %p51, %p52
      %p54 = scmp.ne.s32.totalorder %s40, %s41
      %p55 = scmp.eq.s32.totalorder %s19, 1
      %p56 = por %p54, %p55
      %p58 = scmp.ne.s32.totalorder %s41, %s57
      %p59 = scmp.eq.s32.totalorder %s19, 0
      %p60 = por %p58, %p59
      %s61 = ssub.s32 %s20, %s32
      %s62 = ssub.s32 %s21, %s28
      %s63 = sor.u32 %s61, %s62
      %p64 = scmp.eq.s32.totalorder %s63, 0
      %s66 = sadd.s32 %s65, 1
      %s67 = scalar_select %p64, %s65, %s66
      %p70 = pneg %p64
      %p71 = scmp.eq.s32.totalorder %s13, 1
      %p72 = por %p70, %p71
      %p73 = scmp.ne.s32.totalorder %s65, %s68
      %p74 = scmp.eq.s32.totalorder %s13, 0
      %p75 = por %p73, %p74
      %p76 = scmp.ne.s32.totalorder %s65, %s68
      %p77 = scmp.eq.s32.totalorder %s18, 1
      %p78 = por %p76, %p77
      %p79 = scmp.ne.s32.totalorder %s68, %s69
      %p80 = scmp.eq.s32.totalorder %s18, 0
      %p81 = por %p79, %p80
      %p82 = scmp.ne.s32.totalorder %s68, %s69
      %p83 = scmp.eq.s32.totalorder %s19, 1
      %p84 = por %p82, %p83
      %p86 = scmp.ne.s32.totalorder %s69, %s85
      %p87 = scmp.eq.s32.totalorder %s19, 0
      %p88 = por %p86, %p87
      %p89 = scmp.le.s32.totalorder 1, %s13
      %p90 = scmp.lt.s32.totalorder %s13, 3
      %p91 = pnand %p89, %p90
      %p92 = pneg %p91
      // Predicated region
      $region9: #{tpu_custom_call.1} parent=5 // pred_check
        _
      $region10: #{tpu_custom_call.1} parent=5 // pred_check_branch
        %94 = sbr.rel (%p91) target = $region12
      $region11: #{tpu_custom_call.1} parent=5 // pred_region
        %s95 = ssub.s32 %s13, 1
      $region12: #{tpu_custom_call.1} parent=5 // pred_fallthru
        _
      %p96 = scmp.lt.s32.totalorder %s13, 2
      // Predicated region
      $region13: #{tpu_custom_call.1} parent=5 // pred_check
        %p97 = pneg %p96
      $region14: #{tpu_custom_call.1} parent=5 // pred_check_branch
        %99 = sbr.rel (%p97) target = $region16
      $region15: #{tpu_custom_call.1} parent=5 // pred_region
        // Predicated region
        $region17: #{tpu_custom_call.1} parent=15 // pred_check
          %p100 = pneg %p47
        $region18: #{tpu_custom_call.1} parent=15 // pred_check_branch
          %102 = sbr.rel (%p100) target = $region20
        $region19: #{tpu_custom_call.1} parent=15 // pred_region
          %s103 = sand.u32 %s37, 1
          %s104 = scalar_lea.sflag [#allocation3], %s103
          %s105 = sand.u32 %s37, 1
          %s106 = smul.addr %s105, 64
          %s107 = scalar_lea.vmem [#allocation2], %s106
          %s108 = smul.u32 8, %s21
          %s110 = ssub.s32 1024, 1024
          %111 = vsyncadd %s104, %s110
          %s112 = smul.addr %s20, 8
          %s113 = sadd.s32 %s108, %s112
          %s114 = smul.addr %s113, 128
          %s115 = scalar_lea.hbm %s0, %s114
          %s117 = sshll.u32 %s107, 4
          %s118 = int_to_ptr.vmem [resolvable:$true] %s117
          %120 = dma.hbm_to_vmem [thread:$0]  %s115, 1024, %s118, %s104
        $region20: #{tpu_custom_call.1} parent=15 // pred_fallthru
          _
      $region16: #{tpu_custom_call.1} parent=5 // pred_fallthru
        _
      %p121 = scmp.le.s32.totalorder 1, %s13
      %p122 = scmp.lt.s32.totalorder %s13, 3
      %p123 = pnand %p121, %p122
      %p124 = pneg %p123
      // Predicated region
      $region21: #{tpu_custom_call.1} parent=5 // pred_check
        _
      $region22: #{tpu_custom_call.1} parent=5 // pred_check_branch
        %126 = sbr.rel (%p123) target = $region24
      $region23: #{tpu_custom_call.1} parent=5 // pred_region
        %s127 = ssub.s32 %s13, 1
        %s128 = sand.u32 %s40, 1
        %s129 = scalar_lea.sflag [#allocation3], %s128
        %s130 = sand.u32 %s40, 1
        %s131 = smul.addr %s130, 64
        %s132 = scalar_lea.vmem [#allocation2], %s131
        // Predicated region
        $region25: #{tpu_custom_call.1} parent=23 // pred_check
          %p133 = pneg %p53
        $region26: #{tpu_custom_call.1} parent=23 // pred_check_branch
          %135 = sbr.rel (%p133) target = $region28
        $region27: #{tpu_custom_call.1} parent=23 // pred_region
          %136 = dma.done %s129, 1024
        $region28: #{tpu_custom_call.1} parent=23 // pred_fallthru
          _
        %s137 = sand.u32 %s40, 1
        %s138 = scalar_lea.sflag [#allocation3], %s137
        %s139 = sand.u32 %s40, 1
        %s140 = smul.addr %s139, 64
        %s141 = scalar_lea.vmem [#allocation2], %s140
        %p142 = pneg %p53
        %p143 = pneg %p50
        %p144 = pneg %p81
        %p145 = pneg %p78
        %s146 = sand.u32 %s68, 1
        %s147 = scalar_lea.sflag [#allocation4], %s146
        %s148 = sand.u32 %s68, 1
        %s149 = smul.addr %s148, 32
        %s150 = scalar_lea.vmem [#allocation5], %s149
        %s151 = smul.u32 8, %s23
        %s152 = smul.u32 8, %s23
        %v153 = vld [vmem:[%s132] ss:$8 sm:$0xf]
        %v154 = vld [vmem:[%s132] ss:$8 sm:$0xf0]
        %v155 = vor.u32 %v153, %v154
        %s156 = scalar_lea.vmem %s132, 1 [#allocation2]
        %v157 = vld [vmem:[%s156] ss:$8 sm:$0xf]
        %v158 = vld [vmem:[%s156] ss:$8 sm:$0xf0]
        %v159 = vor.u32 %v157, %v158
        %v160 = vmax.f32 %v155, %v159
        %161 = vst [vmem:[%s150] ss:$4 sm:$0xff] %v160
        %v162 = vld [vmem:[%s156] ss:$8 sm:$0xf]
        %v163 = vld [vmem:[%s156] ss:$8 sm:$0xf0]
        %v164 = vor.u32 %v162, %v163
        %s165 = scalar_lea.vmem %s132, 2 [#allocation2]
        %v166 = vld [vmem:[%s165] ss:$8 sm:$0xf]
        %v167 = vld [vmem:[%s165] ss:$8 sm:$0xf0]
        %v168 = vor.u32 %v166, %v167
        %v169 = vmax.f32 %v164, %v168
        %s170 = scalar_lea.vmem %s132, 3 [#allocation2]
        %v171 = vld [vmem:[%s170] ss:$8 sm:$0xf]
        %v172 = vld [vmem:[%s170] ss:$8 sm:$0xf0]
        %v173 = vor.u32 %v171, %v172
        %v174 = vmax.f32 %v169, %v173
        %s175 = scalar_lea.vmem %s150, 1 [#allocation5]
        %176 = vst [vmem:[%s175] ss:$4 sm:$0xff] %v174
        %v177 = vld [vmem:[%s170] ss:$8 sm:$0xf]
        %v178 = vld [vmem:[%s170] ss:$8 sm:$0xf0]
        %v179 = vor.u32 %v177, %v178
        %s180 = scalar_lea.vmem %s132, 4 [#allocation2]
        %v181 = vld [vmem:[%s180] ss:$8 sm:$0xf]
        %v182 = vld [vmem:[%s180] ss:$8 sm:$0xf0]
        %v183 = vor.u32 %v181, %v182
        %v184 = vmax.f32 %v179, %v183
        %s185 = scalar_lea.vmem %s132, 5 [#allocation2]
        %v186 = vld [vmem:[%s185] ss:$8 sm:$0xf]
        %v187 = vld [vmem:[%s185] ss:$8 sm:$0xf0]
        %v188 = vor.u32 %v186, %v187
        %v189 = vmax.f32 %v184, %v188
        %s190 = scalar_lea.vmem %s150, 2 [#allocation5]
        %191 = vst [vmem:[%s190] ss:$4 sm:$0xff] %v189
        %v192 = vld [vmem:[%s185] ss:$8 sm:$0xf]
        %v193 = vld [vmem:[%s185] ss:$8 sm:$0xf0]
        %v194 = vor.u32 %v192, %v193
        %s195 = scalar_lea.vmem %s132, 6 [#allocation2]
        %v196 = vld [vmem:[%s195] ss:$8 sm:$0xf]
        %v197 = vld [vmem:[%s195] ss:$8 sm:$0xf0]
        %v198 = vor.u32 %v196, %v197
        %v199 = vmax.f32 %v194, %v198
        %s200 = scalar_lea.vmem %s132, 7 [#allocation2]
        %v201 = vld [vmem:[%s200] ss:$8 sm:$0xf]
        %v202 = vld [vmem:[%s200] ss:$8 sm:$0xf0]
        %v203 = vor.u32 %v201, %v202
        %v204 = vmax.f32 %v199, %v203
        %s205 = scalar_lea.vmem %s150, 3 [#allocation5]
        %206 = vst [vmem:[%s205] ss:$4 sm:$0xff] %v204
        %s207 = sand.u32 %s68, 1
        %s208 = scalar_lea.sflag [#allocation4], %s207
        %s209 = sand.u32 %s68, 1
        %s210 = smul.addr %s209, 32
        %s211 = scalar_lea.vmem [#allocation5], %s210
        // Predicated region
        $region29: #{tpu_custom_call.1} parent=23 // pred_check
          %p212 = pneg %p78
        $region30: #{tpu_custom_call.1} parent=23 // pred_check_branch
          %214 = sbr.rel (%p212) target = $region32
        $region31: #{tpu_custom_call.1} parent=23 // pred_region
          %s215 = smul.u32 8, %s23
          %s217 = ssub.s32 512, 512
          %218 = vsyncadd %s208, %s217
          %s219 = smul.addr %s22, 8
          %s220 = sadd.s32 %s215, %s219
          %s221 = smul.addr %s220, 64
          %s222 = scalar_lea.hbm %s1, %s221
          %s224 = sshll.u32 %s211, 4
          %s225 = int_to_ptr.vmem [resolvable:$true] %s224
          %227 = dma.vmem_to_hbm [thread:$0]  %s225, 512, %s222, %s208
        $region32: #{tpu_custom_call.1} parent=23 // pred_fallthru
          _
      $region24: #{tpu_custom_call.1} parent=5 // pred_fallthru
        _
      %p228 = scmp.le.s32.totalorder 2, %s13
      // Predicated region
      $region33: #{tpu_custom_call.1} parent=5 // pred_check
        %p229 = pneg %p228
      $region34: #{tpu_custom_call.1} parent=5 // pred_check_branch
        %231 = sbr.rel (%p229) target = $region36
      $region35: #{tpu_custom_call.1} parent=5 // pred_region
        %s232 = ssub.s32 %s13, 2
        // Predicated region
        $region37: #{tpu_custom_call.1} parent=35 // pred_check
          %p233 = pneg %p84
        $region38: #{tpu_custom_call.1} parent=35 // pred_check_branch
          %235 = sbr.rel (%p233) target = $region40
        $region39: #{tpu_custom_call.1} parent=35 // pred_region
          %s236 = sand.u32 %s69, 1
          %s237 = scalar_lea.sflag [#allocation4], %s236
          %s238 = sand.u32 %s69, 1
          %s239 = smul.addr %s238, 32
          %s240 = scalar_lea.vmem [#allocation5], %s239
          %241 = dma.done %s237, 512
        $region40: #{tpu_custom_call.1} parent=35 // pred_fallthru
          _
      $region36: #{tpu_custom_call.1} parent=5 // pred_fallthru
        _
    $region6: #{tpu_custom_call.1} parent=1 // loop_footer
      %s17 = sadd.s32 1, %s13
    $region7: #{tpu_custom_call.1} parent=1 // loop_footer_branch
      %12 = sbr.rel target = $region3
    $region8: #{tpu_custom_call.1} parent=1 // loop_exit
      _
    %242 = vsyncpa [#allocation3], 1
    %s243 = scalar_lea.sflag [#allocation3], 1
    %244 = vsyncpa %s243, 1
    %245 = vsyncpa [#allocation4], 1
    %s246 = scalar_lea.sflag [#allocation4], 1
    %247 = vsyncpa %s246, 1

</llo_original>
